<compile_context>
chip_gen: v7x
topology: tpu7x:2x2x1
jax: 0.10.0
libtpu: 0.0.40
codegen_flags: <defaults>
</compile_context>

<pallas_src>
import jax
import jax.numpy as jnp
from jax.experimental import pallas as pl
from jax.experimental.pallas import tpu as pltpu


def _round_up(n, m):
    return -(-n // m) * m


def mlp_kernel(xT_ref, w1_ref, b1_ref, w2_ref, b2_ref, w3_ref, b3_ref, o_ref):
    xT = xT_ref[...]                                           # (1, TILE_M), lane-dense
    # Layer 1: x @ w1.T is a K=1 contraction -> pure VPU broadcast mul + relu.
    #   z1.T[h, n] = w1[h, 0] * x[n, 0] + b1[0, h]
    z1 = jnp.maximum(w1_ref[...] * xT + b1_ref[...], 0.0)      # (H, TILE_M)
    # Layer 2: the only real matmul -> MXU.  (z1 @ w2.T).T == w2 @ z1.T
    z2 = jnp.dot(w2_ref[...], z1, preferred_element_type=jnp.float32)
    z2 = jnp.maximum(z2 + b2_ref[...], 0.0)                    # (H, TILE_M)
    # Layer 3: output width 1 -> VPU mul + sublane (XLU) reduce, directly
    # producing the lane-dense (1, TILE_M) output slab.
    z3 = jnp.sum(w3_ref[...] * z2, axis=0, keepdims=True)      # (1, TILE_M)
    o_ref[...] = z3 + b3_ref[0, 0]


def prepare_params(params):
    """One-time kernel-layout prep (hoisted out of the per-call forward)."""
    return {
        "w1": params["w1"],        # (H, 1)   used as-is (column)
        "b1": params["b1"].T,      # (H, 1)   column bias
        "w2": params["w2"],        # (H, H)   used as w2 @ z1.T -> no transpose
        "b2": params["b2"].T,      # (H, 1)   column bias
        "w3": params["w3"].T,      # (H, 1)   column
        "b3": params["b3"],        # (1, 1)   scalar -> SMEM
    }


def regression_learner_forward(x, kparams, *, max_tile_m=16384):
    """Forward pass of RegressionLearner.

    Accepts x as (N, 1) (the PyTorch module's layout), (1, N) or (N,) and
    returns the result in the same layout convention.  Lane-dense (1, N)/(N,)
    inputs avoid the (N,1)<->(1,N) relayout copies entirely.
    """
    x = x.astype(jnp.float32)
    if x.ndim == 2 and x.shape[-1] == 1:        # module layout (N, 1)
        n = x.shape[0]
        xT = x.reshape(1, n)                    # single unavoidable relayout
        layout = "col"
    elif x.ndim == 2 and x.shape[0] == 1:       # lane-dense fast path (1, N)
        n = x.shape[1]
        xT = x
        layout = "row"
    elif x.ndim == 1:                           # flat fast path (N,)
        n = x.shape[0]
        xT = x.reshape(1, n)
        layout = "flat"
    else:
        raise ValueError(f"unsupported input shape {x.shape}")

    h = kparams["w1"].shape[0]

    # Lane-dense batch tile (multiple of 128).  Capped at ceil(n/2) so that
    # n_tiles >= 2 once the batch is large enough -> keeps both TensorCores
    # busy on v7x via the "parallel" grid axis.
    tile_m = max(128, min(max_tile_m, _round_up(pl.cdiv(n, 2), 128)))
    n_tiles = pl.cdiv(n, tile_m)

    # Scoped-VMEM budget: double-buffered (1, tile_m) in/out, z1/z2 f32
    # intermediates, resident (double-buffered) weights; 2x headroom,
    # floored at v5e's 16 MiB default, capped well under v7x's 64 MiB/TC.
    est_bytes = 4 * (2 * 2 * tile_m + 2 * h * tile_m + 2 * (h * h + 4 * h))
    vmem_limit = int(min(48 * 2**20, max(16 * 2**20, 2 * est_bytes)))

    const = lambda i: (0, 0)
    out = pl.pallas_call(
        mlp_kernel,
        out_shape=jax.ShapeDtypeStruct((1, n), jnp.float32),
        grid=(n_tiles,),
        in_specs=[
            pl.BlockSpec((1, tile_m), lambda i: (0, i)),        # x^T batch tile
            pl.BlockSpec((h, 1), const),                        # w1   (resident)
            pl.BlockSpec((h, 1), const),                        # b1^T (resident)
            pl.BlockSpec((h, h), const),                        # w2   (resident)
            pl.BlockSpec((h, 1), const),                        # b2^T (resident)
            pl.BlockSpec((h, 1), const),                        # w3^T (resident)
            pl.BlockSpec(memory_space=pltpu.MemorySpace.SMEM),  # b3 scalar
        ],
        out_specs=pl.BlockSpec((1, tile_m), lambda i: (0, i)),
        compiler_params=pltpu.CompilerParams(
            dimension_semantics=("parallel",),
            vmem_limit_bytes=vmem_limit),
    )(xT, kparams["w1"], kparams["b1"], kparams["w2"], kparams["b2"],
      kparams["w3"], kparams["b3"])

    if layout == "col":
        return out.reshape(n, 1)
    if layout == "flat":
        return out.reshape(n)
    return out


def make_params(hidden_size, key):
    k1, k2, k3 = jax.random.split(key, 3)
    return {
        "w1": jax.random.normal(k1, (hidden_size, 1), jnp.float32),
        "b1": jnp.zeros((1, hidden_size), jnp.float32),
        "w2": jax.random.normal(k2, (hidden_size, hidden_size), jnp.float32),
        "b2": jnp.zeros((1, hidden_size), jnp.float32),
        "w3": jax.random.normal(k3, (1, hidden_size), jnp.float32),
        "b3": jnp.zeros((1, 1), jnp.float32),
    }


def reference_forward(x, p):
    z1 = jax.nn.relu(x @ p["w1"].T + p["b1"])
    z2 = jax.nn.relu(z1 @ p["w2"].T + p["b2"])
    return z2 @ p["w3"].T + p["b3"]


if __name__ == "__main__":
    key = jax.random.PRNGKey(0)
    kp, kx = jax.random.split(key)

    hidden_size = 32
    params = make_params(hidden_size, kp)
    kparams = prepare_params(params)

    # 1) Small case matching the module: batch=8, x: (8, 1).
    batch = 8
    x = jax.random.normal(kx, (batch, 1), jnp.float32)
    out = jax.block_until_ready(regression_learner_forward(x, kparams))
    ref = reference_forward(x, params)
    assert out.shape == (batch, 1)
    assert jnp.allclose(out, ref, atol=1e-4, rtol=1e-4)

    # 2) Ragged multi-tile case: grid > 1 and N not a multiple of tile_m
    #    (exercises the pad-free masked final block).
    batch2 = 300
    x2 = jax.random.normal(jax.random.fold_in(kx, 1), (batch2, 1), jnp.float32)
    out2 = jax.block_until_ready(
        regression_learner_forward(x2, kparams, max_tile_m=128))
    ref2 = reference_forward(x2, params)
    assert out2.shape == (batch2, 1)
    assert jnp.allclose(out2, ref2, atol=1e-4, rtol=1e-4)

    # 3) Lane-dense (1, N) fast path with default large tiles and the v7x
    #    n_tiles >= 2 cap (tile_m = ceil(n/2) rounded up to 128).
    batch3 = 5000
    x3 = jax.random.normal(jax.random.fold_in(kx, 2), (1, batch3), jnp.float32)
    out3 = jax.block_until_ready(regression_learner_forward(x3, kparams))
    ref3 = reference_forward(x3.reshape(batch3, 1), params).reshape(1, batch3)
    assert out3.shape == (1, batch3)
    assert jnp.allclose(out3, ref3, atol=1e-4, rtol=1e-4)

    print("KERNEL_OK")
</pallas_src>

<mosaic_0001>
module attributes {stable_mosaic.version = 11 : i64} {
  func.func @mlp_kernel(%arg0: i32, %arg1: memref<1x128xf32, #tpu.memory_space<vmem>>, %arg2: memref<32x1xf32, #tpu.memory_space<vmem>>, %arg3: memref<32x1xf32, #tpu.memory_space<vmem>>, %arg4: memref<32x32xf32, #tpu.memory_space<vmem>>, %arg5: memref<32x1xf32, #tpu.memory_space<vmem>>, %arg6: memref<32x1xf32, #tpu.memory_space<vmem>>, %arg7: memref<1x1xf32, #tpu.memory_space<smem>>, %arg8: memref<1x128xf32, #tpu.memory_space<vmem>>) attributes {dimension_semantics = [#tpu.dimension_semantics<parallel>], iteration_bounds = array<i64: 1>, scalar_prefetch = 0 : i64, scratch_operands = 0 : i64, tpu.core_type = #tpu.core_type<tc>, window_params = [{transform_indices = @transform_0, window_bounds = array<i64: 1, 128>}, {pipeline_mode = #tpu.pipeline_mode<synchronous>, transform_indices = @transform_1, window_bounds = array<i64: 32, 1>}, {pipeline_mode = #tpu.pipeline_mode<synchronous>, transform_indices = @transform_2, window_bounds = array<i64: 32, 1>}, {pipeline_mode = #tpu.pipeline_mode<synchronous>, transform_indices = @transform_3, window_bounds = array<i64: 32, 32>}, {pipeline_mode = #tpu.pipeline_mode<synchronous>, transform_indices = @transform_4, window_bounds = array<i64: 32, 1>}, {pipeline_mode = #tpu.pipeline_mode<synchronous>, transform_indices = @transform_5, window_bounds = array<i64: 32, 1>}, {transform_indices = @transform_6, window_bounds = array<i64: 1, 1>}, {transform_indices = @transform_7, window_bounds = array<i64: 1, 128>}]} {
    %c0 = arith.constant 0 : index
    %c0_0 = arith.constant 0 : index
    %0 = vector.load %arg1[%c0, %c0_0] : memref<1x128xf32, #tpu.memory_space<vmem>>, vector<1x128xf32>
    %c0_1 = arith.constant 0 : index
    %c0_2 = arith.constant 0 : index
    %1 = vector.load %arg2[%c0_1, %c0_2] : memref<32x1xf32, #tpu.memory_space<vmem>>, vector<32x1xf32>
    %2 = vector.broadcast %1 : vector<32x1xf32> to vector<32x128xf32>
    %3 = vector.broadcast %0 : vector<1x128xf32> to vector<32x128xf32>
    %4 = arith.mulf %2, %3 : vector<32x128xf32>
    %c0_3 = arith.constant 0 : index
    %c0_4 = arith.constant 0 : index
    %5 = vector.load %arg3[%c0_3, %c0_4] : memref<32x1xf32, #tpu.memory_space<vmem>>, vector<32x1xf32>
    %6 = vector.broadcast %5 : vector<32x1xf32> to vector<32x128xf32>
    %7 = arith.addf %4, %6 : vector<32x128xf32>
    %cst = arith.constant 0.000000e+00 : f32
    %8 = vector.broadcast %cst : f32 to vector<32x128xf32>
    %9 = arith.maximumf %7, %8 : vector<32x128xf32>
    %c0_5 = arith.constant 0 : index
    %c0_6 = arith.constant 0 : index
    %10 = vector.load %arg4[%c0_5, %c0_6] : memref<32x32xf32, #tpu.memory_space<vmem>>, vector<32x32xf32>
    %cst_7 = arith.constant dense<0.000000e+00> : vector<32x128xf32>
    %11 = tpu.matmul %10, %9, %cst_7 {dimension_numbers = #tpu.dot_dimension_numbers<[1], [0], [0], [1], [0, 0, 1, 1], [], []>} : vector<32x32xf32>, vector<32x128xf32>, vector<32x128xf32> -> vector<32x128xf32>
    %c0_8 = arith.constant 0 : index
    %c0_9 = arith.constant 0 : index
    %12 = vector.load %arg5[%c0_8, %c0_9] : memref<32x1xf32, #tpu.memory_space<vmem>>, vector<32x1xf32>
    %13 = vector.broadcast %12 : vector<32x1xf32> to vector<32x128xf32>
    %14 = arith.addf %11, %13 : vector<32x128xf32>
    %cst_10 = arith.constant 0.000000e+00 : f32
    %15 = vector.broadcast %cst_10 : f32 to vector<32x128xf32>
    %16 = arith.maximumf %14, %15 : vector<32x128xf32>
    %c0_11 = arith.constant 0 : index
    %c0_12 = arith.constant 0 : index
    %17 = vector.load %arg6[%c0_11, %c0_12] : memref<32x1xf32, #tpu.memory_space<vmem>>, vector<32x1xf32>
    %18 = vector.broadcast %17 : vector<32x1xf32> to vector<32x128xf32>
    %19 = arith.mulf %18, %16 : vector<32x128xf32>
    %cst_13 = arith.constant dense<0.000000e+00> : vector<128xf32>
    %20 = vector.multi_reduction <add>, %19, %cst_13 [0] : vector<32x128xf32> to vector<128xf32>
    %21 = vector.shape_cast %20 : vector<128xf32> to vector<1x128xf32>
    %c0_14 = arith.constant 0 : index
    %c0_15 = arith.constant 0 : index
    %22 = memref.load %arg7[%c0_14, %c0_15] : memref<1x1xf32, #tpu.memory_space<smem>>
    %23 = vector.broadcast %22 : f32 to vector<1x128xf32>
    %24 = arith.addf %21, %23 : vector<1x128xf32>
    %c0_16 = arith.constant 0 : index
    %c0_17 = arith.constant 0 : index
    %25 = vector.load %arg8[%c0_16, %c0_17] : memref<1x128xf32, #tpu.memory_space<vmem>>, vector<1x128xf32>
    tpu.vector_store %arg8[%c0_16, %c0_17], %24 {strides = array<i32>} : memref<1x128xf32, #tpu.memory_space<vmem>>, vector<1x128xf32>,
    return
  }
  func.func @transform_0(%arg0: i32) -> (i32, i32) {
    %c0_i32 = arith.constant 0 : i32
    %c0_i32_0 = arith.constant 0 : i32
    return %c0_i32, %arg0 : i32, i32
  }
  func.func @transform_1(%arg0: i32) -> (i32, i32) {
    %c0_i32 = arith.constant 0 : i32
    %c0_i32_0 = arith.constant 0 : i32
    %c0_i32_1 = arith.constant 0 : i32
    return %c0_i32, %c0_i32_0 : i32, i32
  }
  func.func @transform_2(%arg0: i32) -> (i32, i32) {
    %c0_i32 = arith.constant 0 : i32
    %c0_i32_0 = arith.constant 0 : i32
    %c0_i32_1 = arith.constant 0 : i32
    return %c0_i32, %c0_i32_0 : i32, i32
  }
  func.func @transform_3(%arg0: i32) -> (i32, i32) {
    %c0_i32 = arith.constant 0 : i32
    %c0_i32_0 = arith.constant 0 : i32
    %c0_i32_1 = arith.constant 0 : i32
    return %c0_i32, %c0_i32_0 : i32, i32
  }
  func.func @transform_4(%arg0: i32) -> (i32, i32) {
    %c0_i32 = arith.constant 0 : i32
    %c0_i32_0 = arith.constant 0 : i32
    %c0_i32_1 = arith.constant 0 : i32
    return %c0_i32, %c0_i32_0 : i32, i32
  }
  func.func @transform_5(%arg0: i32) -> (i32, i32) {
    %c0_i32 = arith.constant 0 : i32
    %c0_i32_0 = arith.constant 0 : i32
    %c0_i32_1 = arith.constant 0 : i32
    return %c0_i32, %c0_i32_0 : i32, i32
  }
  func.func @transform_6(%arg0: i32) -> (i32, i32) {
    %c0_i32 = arith.constant 0 : i32
    %c0_i32_0 = arith.constant 0 : i32
    %c0_i32_1 = arith.constant 0 : i32
    return %c0_i32, %c0_i32_0 : i32, i32
  }
  func.func @transform_7(%arg0: i32) -> (i32, i32) {
    %c0_i32 = arith.constant 0 : i32
    %c0_i32_0 = arith.constant 0 : i32
    return %c0_i32, %arg0 : i32, i32
  }
}

</mosaic_0001>

<llo_original>
// kernel: tpu_custom_call.1
$region0: #{tpu_custom_call.1}
  #allocation0 [shape = 'u32[]', space=smem, size = 0x4, offset = 0x4, fixed_abs, tag = 'smem constant byte address 0x4 - core index']
  #allocation1 [shape = 'u32[144,128]{1,0:T(1,128)}', space=vmem, size = 0x12000, scoped, tag = 'internal scratch']
  #allocation2 [shape = 'f32[1,1]{1,0:T(1,128)S(6)}', space=smem, size = 0x200, scoped, tag = 'scoped memory for tpu_custom_call.1']
  %s0 = inlined_call_operand.vmem [shape: f32[1,8], index: 0, kind: input, shape index: {}]
  %s1 = inlined_call_operand.vmem [shape: f32[32,1], index: 1, kind: input, shape index: {}]
  %s2 = inlined_call_operand.vmem [shape: f32[32,1], index: 2, kind: input, shape index: {}]
  %s3 = inlined_call_operand.vmem [shape: f32[32,32], index: 3, kind: input, shape index: {}]
  %s4 = inlined_call_operand.vmem [shape: f32[32,1], index: 4, kind: input, shape index: {}]
  %s5 = inlined_call_operand.vmem [shape: f32[32,1], index: 5, kind: input, shape index: {}]
  %s6 = inlined_call_operand.<no memory space> [shape: f32[1,1], index: 6, kind: input, shape index: {}]
  %s7 = inlined_call_operand.hbm [shape: f32[1,8], index: 7, kind: output, shape index: {}]
  %s8 = sld [smem:[#allocation0]]
  $region38: #{tpu_custom_call.1} parent=0
    _
  %s10 = ssub.s32 1, %s8
  %s11 = scalar_select 0, %s10, %s8
  %12 = sst [smem:[#allocation2]] %s6
  $region1: #{tpu_custom_call.1} parent=0
    #allocation3 [shape = 'u8[512]{0}', space=vmem, size = 0x400, scoped, tag = 'output window, operand 0, single buffered']
    #allocation4 [shape = 's32[1]{0}', space=sflag, size = 0x4, scoped, tag = 'scoped memory for tpu_custom_call.1']
    %13 = vsyncpa [#allocation4], 0
    // Predicated region
    $region2: #{tpu_custom_call.1} parent=1 // pred_check
      _
    $region3: #{tpu_custom_call.1} parent=1 // pred_check_branch
      %15 = sbr.rel (0) target = $region5
    $region4: #{tpu_custom_call.1} parent=1 // pred_region
      _
    $region5: #{tpu_custom_call.1} parent=1 // pred_fallthru
      _
    // Predicated region
    $region6: #{tpu_custom_call.1} parent=1 // pred_check
      _
    $region7: #{tpu_custom_call.1} parent=1 // pred_check_branch
      %17 = sbr.rel (0) target = $region9
    $region8: #{tpu_custom_call.1} parent=1 // pred_region
      _
    $region9: #{tpu_custom_call.1} parent=1 // pred_fallthru
      _
    // Predicated region
    $region10: #{tpu_custom_call.1} parent=1 // pred_check
      _
    $region11: #{tpu_custom_call.1} parent=1 // pred_check_branch
      %19 = sbr.rel (0) target = $region13
    $region12: #{tpu_custom_call.1} parent=1 // pred_region
      _
    $region13: #{tpu_custom_call.1} parent=1 // pred_fallthru
      _
    // Predicated region
    $region14: #{tpu_custom_call.1} parent=1 // pred_check
      _
    $region15: #{tpu_custom_call.1} parent=1 // pred_check_branch
      %21 = sbr.rel (0) target = $region17
    $region16: #{tpu_custom_call.1} parent=1 // pred_region
      _
    $region17: #{tpu_custom_call.1} parent=1 // pred_fallthru
      _
    // Predicated region
    $region18: #{tpu_custom_call.1} parent=1 // pred_check
      _
    $region19: #{tpu_custom_call.1} parent=1 // pred_check_branch
      %23 = sbr.rel (0) target = $region21
    $region20: #{tpu_custom_call.1} parent=1 // pred_region
      _
    $region21: #{tpu_custom_call.1} parent=1 // pred_fallthru
      _
    // Predicated region
    $region22: #{tpu_custom_call.1} parent=1 // pred_check
      _
    $region23: #{tpu_custom_call.1} parent=1 // pred_check_branch
      %25 = sbr.rel (0) target = $region25
    $region24: #{tpu_custom_call.1} parent=1 // pred_region
      _
    $region25: #{tpu_custom_call.1} parent=1 // pred_fallthru
      _
    // Predicated region
    $region26: #{tpu_custom_call.1} parent=1 // pred_check
      _
    $region27: #{tpu_custom_call.1} parent=1 // pred_check_branch
      %27 = sbr.rel (0) target = $region29
    $region28: #{tpu_custom_call.1} parent=1 // pred_region
      _
    $region29: #{tpu_custom_call.1} parent=1 // pred_fallthru
      _
    %v28 = vld [vmem:[%s0] sm:$0x1]
    %v29 = vld [vmem:[%s1] sm:$0xff]
    %v30 = vld [vmem:[%s1 + $0x8] sm:$0xff]
    %v31 = vld [vmem:[%s1 + $0x10] sm:$0xff]
    %v32 = vld [vmem:[%s1 + $0x18] sm:$0xff]
    %34 = vset.pattern.permute.xlu0 0
    %35 = vperm.xlu0 %34, %v29
    %v36 = vpop.permute.xlu0 %35
    %39 = vset.pattern.permute.xlu0 0
    %40 = vperm.xlu0 %39, %v30
    %v41 = vpop.permute.xlu0 %40
    %44 = vset.pattern.permute.xlu0 0
    %45 = vperm.xlu0 %44, %v31
    %v46 = vpop.permute.xlu0 %45
    %49 = vset.pattern.permute.xlu0 0
    %50 = vperm.xlu0 %49, %v32
    %v51 = vpop.permute.xlu0 %50
    %v54 = vlaneseq
    %v55 = vshrl.u32 %v54, 7
    %v56 = vsub.s32 0, %v55
    %v57 = vrot.slane %v28, %v56
    %v59 = vmul.f32 %v36, %v57
    %v60 = vmul.f32 %v41, %v57
    %v61 = vmul.f32 %v46, %v57
    %v62 = vmul.f32 %v51, %v57
    %v63 = vld [vmem:[%s2] sm:$0xff]
    %v64 = vld [vmem:[%s2 + $0x8] sm:$0xff]
    %v65 = vld [vmem:[%s2 + $0x10] sm:$0xff]
    %v66 = vld [vmem:[%s2 + $0x18] sm:$0xff]
    %68 = vset.pattern.permute.xlu0 0
    %69 = vperm.xlu0 %68, %v63
    %v70 = vpop.permute.xlu0 %69
    %73 = vset.pattern.permute.xlu0 0
    %74 = vperm.xlu0 %73, %v64
    %v75 = vpop.permute.xlu0 %74
    %78 = vset.pattern.permute.xlu0 0
    %79 = vperm.xlu0 %78, %v65
    %v80 = vpop.permute.xlu0 %79
    %83 = vset.pattern.permute.xlu0 0
    %84 = vperm.xlu0 %83, %v66
    %v85 = vpop.permute.xlu0 %84
    %v87 = vadd.f32 %v59, %v70
    %v88 = vadd.f32 %v60, %v75
    %v89 = vadd.f32 %v61, %v80
    %v90 = vadd.f32 %v62, %v85
    %v91 = vmax.f32 %v87, 0.0
    %v92 = vmax.f32 %v88, 0.0
    %v93 = vmax.f32 %v89, 0.0
    %v94 = vmax.f32 %v90, 0.0
    %v95 = vld [vmem:[%s3] sm:$0xff]
    %v96 = vld [vmem:[%s3 + $0x8] sm:$0xff]
    %v97 = vld [vmem:[%s3 + $0x10] sm:$0xff]
    %v98 = vld [vmem:[%s3 + $0x18] sm:$0xff]
    %v99 = vld [vmem:[%s4] sm:$0xff]
    %v100 = vld [vmem:[%s4 + $0x8] sm:$0xff]
    %v101 = vld [vmem:[%s4 + $0x10] sm:$0xff]
    %v102 = vld [vmem:[%s4 + $0x18] sm:$0xff]
    %104 = vset.pattern.permute.xlu0 0
    %105 = vperm.xlu0 %104, %v99
    %v106 = vpop.permute.xlu0 %105
    %109 = vset.pattern.permute.xlu0 0
    %110 = vperm.xlu0 %109, %v100
    %v111 = vpop.permute.xlu0 %110
    %114 = vset.pattern.permute.xlu0 0
    %115 = vperm.xlu0 %114, %v101
    %v116 = vpop.permute.xlu0 %115
    %119 = vset.pattern.permute.xlu0 0
    %120 = vperm.xlu0 %119, %v102
    %v121 = vpop.permute.xlu0 %120
    %vm123 = vcmask 261120
    %v125 = vsel %vm123, %v95, 0
    %v128 = vsel %vm123, %v96, 0
    %v131 = vsel %vm123, %v97, 0
    %v134 = vsel %vm123, %v98, 0
    %136 = vmatprep.subr.mxu0 0.0
    %137 = vmatpush1.msra.mxu0 %v91
    %138 = vmatprep.subr.mxu0 0.0
    %139 = vmatpush1.msra.mxu0 %v92
    %140 = vmatprep.subr.mxu0 0.0
    %141 = vmatpush1.msra.mxu0 %v93
    %142 = vmatprep.subr.mxu0 0.0
    %143 = vmatpush1.msra.mxu0 %v94
    %144 = vmatprep.subr.mxu0 0.0
    %145 = vmatpush1.msra.mxu0 0.0
    %146 = vmatprep.subr.mxu0 0.0
    %147 = vmatpush1.msra.mxu0 0.0
    %148 = vmatprep.subr.mxu0 0.0
    %149 = vmatpush1.msra.mxu0 0.0
    %150 = vmatprep.subr.mxu0 0.0
    %151 = vmatpush1.msra.mxu0 0.0
    %152 = vmatprep.subr.mxu0 0.0
    %153 = vmatpush1.msra.mxu0 0.0
    %154 = vmatprep.subr.mxu0 0.0
    %155 = vmatpush1.msra.mxu0 0.0
    %156 = vmatprep.subr.mxu0 0.0
    %157 = vmatpush1.msra.mxu0 0.0
    %158 = vmatprep.subr.mxu0 0.0
    %159 = vmatpush1.msra.mxu0 0.0
    %160 = vmatprep.subr.mxu0 0.0
    %161 = vmatpush1.msra.mxu0 0.0
    %162 = vmatprep.subr.mxu0 0.0
    %163 = vmatpush1.msra.mxu0 0.0
    %164 = vmatprep.subr.mxu0 0.0
    %165 = vmatpush1.msra.mxu0 0.0
    %166 = vmatprep.subr.mxu0 0.0
    %167 = vmatpush1.msra.mxu0 0.0
    %168 = vmatprep.subr.mxu0 0.0
    %169 = vmatpush1.msra.mxu0 0.0
    %170 = vmatprep.subr.mxu0 0.0
    %171 = vmatpush1.msra.mxu0 0.0
    %172 = vmatprep.subr.mxu0 0.0
    %173 = vmatpush1.msra.mxu0 0.0
    %174 = vmatprep.subr.mxu0 0.0
    %175 = vmatpush1.msra.mxu0 0.0
    %176 = vmatprep.subr.mxu0 0.0
    %177 = vmatpush1.msra.mxu0 0.0
    %178 = vmatprep.subr.mxu0 0.0
    %179 = vmatpush1.msra.mxu0 0.0
    %180 = vmatprep.subr.mxu0 0.0
    %181 = vmatpush1.msra.mxu0 0.0
    %182 = vmatprep.subr.mxu0 0.0
    %183 = vmatpush1.msra.mxu0 0.0
    %184 = vmatprep.subr.mxu0 0.0
    %185 = vmatpush1.msra.mxu0 0.0
    %186 = vmatprep.subr.mxu0 0.0
    %187 = vmatpush1.msra.mxu0 0.0
    %188 = vmatprep.subr.mxu0 0.0
    %189 = vmatpush1.msra.mxu0 0.0
    %190 = vmatprep.subr.mxu0 0.0
    %191 = vmatpush1.msra.mxu0 0.0
    %192 = vmatprep.subr.mxu0 0.0
    %193 = vmatpush1.msra.mxu0 0.0
    %194 = vmatprep.subr.mxu0 0.0
    %195 = vmatpush1.msra.mxu0 0.0
    %196 = vmatprep.subr.mxu0 0.0
    %197 = vmatpush1.msra.mxu0 0.0
    %198 = vmatprep.subr.mxu0 0.0
    %199 = vmatpush1.msra.mxu0 0.0
    %200 = vmatprep.mubr.f32.mxu0 0.0
    %201 = vmatmul.mubr.f32.gmra.mrb[0].mxu0 %v125
    %v202 = vpop.f32.mrb[0].mxu0
    %v203 = vadd.f32 %v106, %v202
    %v204 = vpop.f32.mrb[0].mxu0
    %205 = vmatprep.mubr.f32.mxu0 0.0
    %206 = vmatmul.mubr.f32.gmra.mrb[0].mxu0 %v128
    %v207 = vpop.f32.mrb[0].mxu0
    %v208 = vadd.f32 %v111, %v207
    %v209 = vpop.f32.mrb[0].mxu0
    %210 = vmatprep.mubr.f32.mxu0 0.0
    %211 = vmatmul.mubr.f32.gmra.mrb[0].mxu0 %v131
    %v212 = vpop.f32.mrb[0].mxu0
    %v213 = vadd.f32 %v116, %v212
    %v214 = vpop.f32.mrb[0].mxu0
    %215 = vmatprep.mubr.f32.mxu0 0.0
    %216 = vmatmul.mubr.f32.gmra.mrb[0].mxu0 %v134
    %v217 = vpop.f32.mrb[0].mxu0
    %v218 = vadd.f32 %v121, %v217
    %v219 = vpop.f32.mrb[0].mxu0
    %220 = vdwg.mxu0
    %v221 = vmax.f32 %v203, 0.0
    %v222 = vmax.f32 %v208, 0.0
    %v223 = vmax.f32 %v213, 0.0
    %v224 = vmax.f32 %v218, 0.0
    %v225 = vld [vmem:[%s5] sm:$0xff]
    %v226 = vld [vmem:[%s5 + $0x8] sm:$0xff]
    %v227 = vld [vmem:[%s5 + $0x10] sm:$0xff]
    %v228 = vld [vmem:[%s5 + $0x18] sm:$0xff]
    %230 = vset.pattern.permute.xlu0 0
    %231 = vperm.xlu0 %230, %v225
    %v232 = vpop.permute.xlu0 %231
    %235 = vset.pattern.permute.xlu0 0
    %236 = vperm.xlu0 %235, %v226
    %v237 = vpop.permute.xlu0 %236
    %240 = vset.pattern.permute.xlu0 0
    %241 = vperm.xlu0 %240, %v227
    %v242 = vpop.permute.xlu0 %241
    %245 = vset.pattern.permute.xlu0 0
    %246 = vperm.xlu0 %245, %v228
    %v247 = vpop.permute.xlu0 %246
    %v249 = vmul.f32 %v232, %v221
    %v250 = vmul.f32 %v237, %v222
    %v251 = vmul.f32 %v242, %v223
    %v252 = vmul.f32 %v247, %v224
    %v253 = vadd.f32 %v249, %v250
    %v254 = vadd.f32 %v253, %v251
    %v255 = vadd.f32 %v254, %v252
    %v256 = vrot.slane %v255, 4
    %v257 = vadd.f32 %v255, %v256
    %v258 = vrot.slane %v257, 2
    %v259 = vadd.f32 %v257, %v258
    %v260 = vrot.slane %v259, 1
    %v261 = vadd.f32 %v259, %v260
    %s262 = sld [smem:[#allocation2]]
    %v263 = vstv %s262
    %v264 = vadd.f32 %v261, %v263
    %265 = vst [vmem:[#allocation3] sm:$0x1] %v264
    // Predicated region
    $region30: #{tpu_custom_call.1} parent=1 // pred_check
      _
    $region31: #{tpu_custom_call.1} parent=1 // pred_check_branch
      %267 = sbr.rel (0) target = $region33
    $region32: #{tpu_custom_call.1} parent=1 // pred_region
      %s269 = ssub.s32 16, 16
      %270 = vsyncadd [#allocation4], %s269
      %s272 = sshll.u32 [#allocation3], 4
      %s273 = int_to_ptr.vmem [resolvable:$true] %s272
      %275 = dma.vmem_to_hbm [thread:$0]  %s273, 16, %s7, [#allocation4]
    $region33: #{tpu_custom_call.1} parent=1 // pred_fallthru
      _
    // Predicated region
    $region34: #{tpu_custom_call.1} parent=1 // pred_check
      _
    $region35: #{tpu_custom_call.1} parent=1 // pred_check_branch
      %277 = sbr.rel (0) target = $region37
    $region36: #{tpu_custom_call.1} parent=1 // pred_region
      %278 = dma.done [#allocation4], 16
    $region37: #{tpu_custom_call.1} parent=1 // pred_fallthru
      _
    %279 = vsyncpa [#allocation4], 1

</llo_original>
